<compile_context>
chip_gen: v6e
topology: v6e:2x2x1
jax: 0.10.0
libtpu: 0.0.40
codegen_flags: <defaults>
</compile_context>

<pallas_src>
import jax
import jax.numpy as jnp
from jax.experimental import pallas as pl
from jax.experimental.pallas import tpu as pltpu

_F = 15       # true hidden width
_FP = 16      # padded hidden width (sublane-friendly: 2 packed sublane groups)

# Packed parameter slab column layout (shape (_FP, _SLAB_W), rows 0.._F-1 are real):
_W2_COL = 0    # [:, 0:16]   W2^T (zero padded to 16x16)
_W3_COL = 16   # [:, 16:32]  W3^T (zero padded to 16x16)
_W1_COL = 32   # [:, 32]     layer-1 weight column (15 values)
_W4_COL = 33   # [:, 33]     layer-4 weight column (15 values)
_B1_COL = 34   # [:, 34]     bias 1
_B2_COL = 35   # [:, 35]     bias 2
_B3_COL = 36   # [:, 36]     bias 3
_B4_COL = 37   # [0, 37]     bias 4 (scalar)
_SLAB_W = 48


def _mlp_kernel(x_ref, p_ref, o_ref):
    # x_ref: (1, tile_n)        batch on lanes
    # p_ref: (_FP, _SLAB_W)     packed parameters (same block every grid step)
    # o_ref: (1, tile_n)
    x = x_ref[...]                              # (1, T)
    P = p_ref[...]                              # (16, 48)

    w2t = P[:, _W2_COL:_W2_COL + _FP]           # (16, 16)  = W2^T, zero padded
    w3t = P[:, _W3_COL:_W3_COL + _FP]           # (16, 16)  = W3^T, zero padded
    w1c = P[:, _W1_COL:_W1_COL + 1]             # (16, 1)
    w4c = P[:, _W4_COL:_W4_COL + 1]             # (16, 1)
    b1c = P[:, _B1_COL:_B1_COL + 1]             # (16, 1)
    b2c = P[:, _B2_COL:_B2_COL + 1]             # (16, 1)
    b3c = P[:, _B3_COL:_B3_COL + 1]             # (16, 1)
    b4s = P[0:1, _B4_COL:_B4_COL + 1]           # (1, 1)

    # Layer 1 (in_features == 1): VPU broadcast outer product, keep it off the MXU.
    # Padded rows (15) of w1c/b1c are 0, and relu(0)=0 -> padded feature stays 0.
    h = jnp.maximum(w1c * x + b1c, 0.0)         # (16, T)

    # Layers 2 & 3: dense (16x16) @ (16xT) matmuls on the MXU; contraction over the
    # 16 sublanes, batch stays lane-dense.  Zero-padded rows/cols keep row 15 at 0.
    h = jnp.maximum(
        jnp.dot(w2t, h, preferred_element_type=jnp.float32) + b2c, 0.0)
    h = jnp.maximum(
        jnp.dot(w3t, h, preferred_element_type=jnp.float32) + b3c, 0.0)

    # Layer 4 (out_features == 1): elementwise multiply + sublane (XLU) reduction.
    y = jnp.sum(w4c * h, axis=0, keepdims=True) + b4s   # (1, T)
    o_ref[...] = y.astype(o_ref.dtype)


def pack_params(params):
    """Pack all weights/biases into a single (16, 48) f32 slab (kernel layout)."""
    w1, b1 = params["w1"], params["b1"]   # (1, 15), (1, 15)
    w2, b2 = params["w2"], params["b2"]   # (15, 15), (1, 15)
    w3, b3 = params["w3"], params["b3"]   # (15, 15), (1, 15)
    w4, b4 = params["w4"], params["b4"]   # (15, 1), (1, 1)

    slab = jnp.zeros((_FP, _SLAB_W), jnp.float32)
    slab = slab.at[:_F, _W2_COL:_W2_COL + _F].set(w2.T)
    slab = slab.at[:_F, _W3_COL:_W3_COL + _F].set(w3.T)
    slab = slab.at[:_F, _W1_COL].set(w1[0, :])
    slab = slab.at[:_F, _W4_COL].set(w4[:, 0])
    slab = slab.at[:_F, _B1_COL].set(b1[0, :])
    slab = slab.at[:_F, _B2_COL].set(b2[0, :])
    slab = slab.at[:_F, _B3_COL].set(b3[0, :])
    slab = slab.at[0, _B4_COL].set(b4[0, 0])
    return slab


def mlp_forward(x, params, *, tile_n=512):
    """x: (N, 1) float32.  params: dict of w1..w4 (in,out) and b1..b4 (1,out)."""
    N, one = x.shape
    assert one == 1
    assert tile_n % 128 == 0, "tile_n must be a multiple of the 128-lane width"

    n_blocks = pl.cdiv(N, tile_n)
    n_pad = n_blocks * tile_n

    # Wrapper-side layout plumbing: batch onto the lane axis, pad to the grid.
    xt = jnp.pad(x[:, 0], (0, n_pad - N)).reshape(1, n_pad).astype(jnp.float32)
    slab = pack_params(params)

    yt = pl.pallas_call(
        _mlp_kernel,
        out_shape=jax.ShapeDtypeStruct((1, n_pad), jnp.float32),
        grid_spec=pltpu.PrefetchScalarGridSpec(
            num_scalar_prefetch=0,
            grid=(n_blocks,),
            in_specs=[
                pl.BlockSpec((1, tile_n), lambda i: (0, i)),        # lane-dense x tile
                pl.BlockSpec((_FP, _SLAB_W), lambda i: (0, 0)),     # resident param slab
            ],
            out_specs=pl.BlockSpec((1, tile_n), lambda i: (0, i)),  # lane-dense output
        ),
        compiler_params=pltpu.CompilerParams(
            dimension_semantics=("parallel",),   # batch blocks shard across TCs (v7x)
        ),
    )(xt, slab)

    return yt[0, :N].reshape(N, 1)


def init_params(key):
    """Deterministic init mimicking PyTorch's default Linear init: U(-1/sqrt(fan_in), +)."""
    sizes = [(1, 15), (15, 15), (15, 15), (15, 1)]
    params = {}
    keys = jax.random.split(key, 2 * len(sizes))
    for idx, (fan_in, fan_out) in enumerate(sizes):
        bound = 1.0 / (fan_in ** 0.5)
        w = jax.random.uniform(keys[2 * idx], (fan_in, fan_out),
                               minval=-bound, maxval=bound, dtype=jnp.float32)
        b = jax.random.uniform(keys[2 * idx + 1], (1, fan_out),
                               minval=-bound, maxval=bound, dtype=jnp.float32)
        params[f"w{idx + 1}"] = w
        params[f"b{idx + 1}"] = b
    return params


def reference_forward(x, p):
    h = jnp.maximum(x @ p["w1"] + p["b1"], 0.0)
    h = jnp.maximum(h @ p["w2"] + p["b2"], 0.0)
    h = jnp.maximum(h @ p["w3"] + p["b3"], 0.0)
    return h @ p["w4"] + p["b4"]


if __name__ == "__main__":
    key = jax.random.PRNGKey(0)
    params = init_params(key)

    # Same shape as the PyTorch spec: torch.linspace(-1, 1, 1000).reshape(-1, 1)
    N = 1000
    x = jnp.linspace(-1.0, 1.0, N, dtype=jnp.float32).reshape(-1, 1)

    y = mlp_forward(x, params, tile_n=512)   # N padded to 1024 -> grid=(2,)
    y = jax.block_until_ready(y)

    y_ref = reference_forward(x, params)
    assert y.shape == (N, 1)
    assert jnp.allclose(y, y_ref, atol=1e-5, rtol=1e-5), "mismatch vs JAX reference"

    print("KERNEL_OK")
</pallas_src>

<mosaic_0001>
module attributes {stable_mosaic.version = 11 : i64} {
  func.func @_mlp_kernel(%arg0: i32, %arg1: memref<1x512xf32, #tpu.memory_space<vmem>>, %arg2: memref<16x48xf32, #tpu.memory_space<vmem>>, %arg3: memref<1x512xf32, #tpu.memory_space<vmem>>) attributes {dimension_semantics = [#tpu.dimension_semantics<parallel>], iteration_bounds = array<i64: 2>, scalar_prefetch = 0 : i64, scratch_operands = 0 : i64, tpu.core_type = #tpu.core_type<tc>, window_params = [{transform_indices = @transform_0, window_bounds = array<i64: 1, 512>}, {pipeline_mode = #tpu.pipeline_mode<synchronous>, transform_indices = @transform_1, window_bounds = array<i64: 16, 48>}, {transform_indices = @transform_2, window_bounds = array<i64: 1, 512>}]} {
    %c0 = arith.constant 0 : index
    %c0_0 = arith.constant 0 : index
    %0 = vector.load %arg1[%c0, %c0_0] : memref<1x512xf32, #tpu.memory_space<vmem>>, vector<1x512xf32>
    %c0_1 = arith.constant 0 : index
    %c0_2 = arith.constant 0 : index
    %1 = vector.load %arg2[%c0_1, %c0_2] : memref<16x48xf32, #tpu.memory_space<vmem>>, vector<16x48xf32>
    %2 = vector.extract_strided_slice %1 {offsets = [0, 0], sizes = [16, 16], strides = [1, 1]} : vector<16x48xf32> to vector<16x16xf32>
    %3 = vector.extract_strided_slice %1 {offsets = [0, 16], sizes = [16, 16], strides = [1, 1]} : vector<16x48xf32> to vector<16x16xf32>
    %4 = vector.extract_strided_slice %1 {offsets = [0, 32], sizes = [16, 1], strides = [1, 1]} : vector<16x48xf32> to vector<16x1xf32>
    %5 = vector.extract_strided_slice %1 {offsets = [0, 33], sizes = [16, 1], strides = [1, 1]} : vector<16x48xf32> to vector<16x1xf32>
    %6 = vector.extract_strided_slice %1 {offsets = [0, 34], sizes = [16, 1], strides = [1, 1]} : vector<16x48xf32> to vector<16x1xf32>
    %7 = vector.extract_strided_slice %1 {offsets = [0, 35], sizes = [16, 1], strides = [1, 1]} : vector<16x48xf32> to vector<16x1xf32>
    %8 = vector.extract_strided_slice %1 {offsets = [0, 36], sizes = [16, 1], strides = [1, 1]} : vector<16x48xf32> to vector<16x1xf32>
    %9 = vector.extract_strided_slice %1 {offsets = [0, 37], sizes = [1, 1], strides = [1, 1]} : vector<16x48xf32> to vector<1x1xf32>
    %10 = vector.broadcast %4 : vector<16x1xf32> to vector<16x512xf32>
    %11 = vector.broadcast %0 : vector<1x512xf32> to vector<16x512xf32>
    %12 = arith.mulf %10, %11 : vector<16x512xf32>
    %13 = vector.broadcast %6 : vector<16x1xf32> to vector<16x512xf32>
    %14 = arith.addf %12, %13 : vector<16x512xf32>
    %cst = arith.constant 0.000000e+00 : f32
    %15 = vector.broadcast %cst : f32 to vector<16x512xf32>
    %16 = arith.maximumf %14, %15 : vector<16x512xf32>
    %cst_3 = arith.constant dense<0.000000e+00> : vector<16x512xf32>
    %17 = tpu.matmul %2, %16, %cst_3 {dimension_numbers = #tpu.dot_dimension_numbers<[1], [0], [0], [1], [0, 0, 1, 1], [], []>} : vector<16x16xf32>, vector<16x512xf32>, vector<16x512xf32> -> vector<16x512xf32>
    %18 = vector.broadcast %7 : vector<16x1xf32> to vector<16x512xf32>
    %19 = arith.addf %17, %18 : vector<16x512xf32>
    %cst_4 = arith.constant 0.000000e+00 : f32
    %20 = vector.broadcast %cst_4 : f32 to vector<16x512xf32>
    %21 = arith.maximumf %19, %20 : vector<16x512xf32>
    %cst_5 = arith.constant dense<0.000000e+00> : vector<16x512xf32>
    %22 = tpu.matmul %3, %21, %cst_5 {dimension_numbers = #tpu.dot_dimension_numbers<[1], [0], [0], [1], [0, 0, 1, 1], [], []>} : vector<16x16xf32>, vector<16x512xf32>, vector<16x512xf32> -> vector<16x512xf32>
    %23 = vector.broadcast %8 : vector<16x1xf32> to vector<16x512xf32>
    %24 = arith.addf %22, %23 : vector<16x512xf32>
    %cst_6 = arith.constant 0.000000e+00 : f32
    %25 = vector.broadcast %cst_6 : f32 to vector<16x512xf32>
    %26 = arith.maximumf %24, %25 : vector<16x512xf32>
    %27 = vector.broadcast %5 : vector<16x1xf32> to vector<16x512xf32>
    %28 = arith.mulf %27, %26 : vector<16x512xf32>
    %cst_7 = arith.constant dense<0.000000e+00> : vector<512xf32>
    %29 = vector.multi_reduction <add>, %28, %cst_7 [0] : vector<16x512xf32> to vector<512xf32>
    %30 = vector.shape_cast %29 : vector<512xf32> to vector<1x512xf32>
    %31 = vector.broadcast %9 : vector<1x1xf32> to vector<1x512xf32>
    %32 = arith.addf %30, %31 : vector<1x512xf32>
    %c0_8 = arith.constant 0 : index
    %c0_9 = arith.constant 0 : index
    %33 = vector.load %arg3[%c0_8, %c0_9] : memref<1x512xf32, #tpu.memory_space<vmem>>, vector<1x512xf32>
    tpu.vector_store %arg3[%c0_8, %c0_9], %32 {strides = array<i32>} : memref<1x512xf32, #tpu.memory_space<vmem>>, vector<1x512xf32>,
    return
  }
  func.func @transform_0(%arg0: i32) -> (i32, i32) {
    %c0_i32 = arith.constant 0 : i32
    %c0_i32_0 = arith.constant 0 : i32
    return %c0_i32, %arg0 : i32, i32
  }
  func.func @transform_1(%arg0: i32) -> (i32, i32) {
    %c0_i32 = arith.constant 0 : i32
    %c0_i32_0 = arith.constant 0 : i32
    %c0_i32_1 = arith.constant 0 : i32
    return %c0_i32, %c0_i32_0 : i32, i32
  }
  func.func @transform_2(%arg0: i32) -> (i32, i32) {
    %c0_i32 = arith.constant 0 : i32
    %c0_i32_0 = arith.constant 0 : i32
    return %c0_i32, %arg0 : i32, i32
  }
}

</mosaic_0001>

<llo_original>
// kernel: tpu_custom_call.1
$region0: #{tpu_custom_call.1}
  #allocation0 [shape = 'u32[]', space=smem, size = 0x4, offset = 0x4, fixed_abs, tag = 'smem constant byte address 0x4 - core index']
  #allocation1 [shape = 'u32[144,128]{1,0:T(1,128)}', space=vmem, size = 0x12000, scoped, tag = 'internal scratch']
  %s0 = inlined_call_operand.hbm [shape: f32[1,1024], index: 0, kind: input, shape index: {}]
  %s1 = inlined_call_operand.hbm [shape: f32[16,48], index: 1, kind: input, shape index: {}]
  %s2 = inlined_call_operand.hbm [shape: f32[1,1024], index: 2, kind: output, shape index: {}]
  %s3 = sld [smem:[#allocation0]]
  $region49: #{tpu_custom_call.1} parent=0
    _
  %s5 = ssub.s32 1, %s3
  %s6 = scalar_select 0, %s5, %s3
  $region1: #{tpu_custom_call.1} parent=0
    #allocation2 [shape = 'u8[4096]{0}', space=vmem, size = 0x1000, scoped, tag = 'input window, operand 0']
    #allocation3 [shape = 's32[2]{0}', space=sflag, size = 0x8, scoped, tag = 'scoped memory for tpu_custom_call.1']
    #allocation4 [shape = 's32[2]{0}', space=sflag, size = 0x8, scoped, tag = 'scoped memory for tpu_custom_call.1']
    #allocation5 [shape = 'u8[8192]{0}', space=vmem, size = 0x2000, scoped, tag = 'input window, operand 1, single buffered']
    #allocation6 [shape = 's32[1]{0}', space=sflag, size = 0x4, scoped, tag = 'scoped memory for tpu_custom_call.1']
    #allocation7 [shape = 'u8[4096]{0}', space=vmem, size = 0x1000, scoped, tag = 'output window, operand 0']
    %7 = vsyncpa [#allocation3], 0
    %s8 = scalar_lea.sflag [#allocation3], 1
    %9 = vsyncpa %s8, 0
    %10 = vsyncpa [#allocation6], 0
    %11 = vsyncpa [#allocation4], 0
    %s12 = scalar_lea.sflag [#allocation4], 1
    %13 = vsyncpa %s12, 0
    loop: start=0, step=1, limit=4
    $region2: #{tpu_custom_call.1} parent=1 // loop_pre_header
      _
    $region3: #{tpu_custom_call.1} parent=1 // loop_header
      %s15 = sphi 0, %s19
      %p16 = scmp.ge.s32.totalorder %s15, 4
      %s25 = sphi 0, %s27
      %s28 = sphi 0, %s25
      %s29 = sphi 0, %s28
      %s45 = sphi 0, %s29
      %s49 = sphi 0, %s49
      %s51 = sphi 0, %s49
      %s52 = sphi 0, %s51
      %s66 = sphi 0, %s52
      %s72 = sphi 0, %s74
      %s75 = sphi 0, %s72
      %s76 = sphi 0, %s75
      %s92 = sphi 0, %s76
    $region4: #{tpu_custom_call.1} parent=1 // loop_header_branch
      %18 = sbr.rel (%p16) target = $region8
    $region5: #{tpu_custom_call.1} parent=1 // loop_body
      %s20 = ssub.s32 %s15, 1
      %s21 = ssub.s32 %s15, 2
      %s22 = sadd.s32 %s15, 1
      %s23 = ssub.s32 %s15, %s22
      %p24 = scmp.eq.s32.totalorder %s23, 0
      %s26 = sadd.s32 %s25, 1
      %s27 = scalar_select %p24, %s25, %s26
      %p30 = pneg %p24
      %p31 = scmp.eq.s32.totalorder %s15, 1
      %p32 = por %p30, %p31
      %p33 = scmp.ne.s32.totalorder %s25, %s28
      %p34 = scmp.eq.s32.totalorder %s15, 0
      %p35 = por %p33, %p34
      %p36 = scmp.ne.s32.totalorder %s25, %s28
      %p37 = scmp.eq.s32.totalorder %s20, 1
      %p38 = por %p36, %p37
      %p39 = scmp.ne.s32.totalorder %s28, %s29
      %p40 = scmp.eq.s32.totalorder %s20, 0
      %p41 = por %p39, %p40
      %p42 = scmp.ne.s32.totalorder %s28, %s29
      %p43 = scmp.eq.s32.totalorder %s21, 1
      %p44 = por %p42, %p43
      %p46 = scmp.ne.s32.totalorder %s29, %s45
      %p47 = scmp.eq.s32.totalorder %s21, 0
      %p48 = por %p46, %p47
      %s50 = sadd.s32 %s49, 1
      %p53 = scmp.eq.s32.totalorder %s15, 1
      %p54 = scmp.ne.s32.totalorder %s49, %s51
      %p55 = scmp.eq.s32.totalorder %s15, 0
      %p56 = por %p54, %p55
      %p57 = scmp.ne.s32.totalorder %s49, %s51
      %p58 = scmp.eq.s32.totalorder %s20, 1
      %p59 = por %p57, %p58
      %p60 = scmp.ne.s32.totalorder %s51, %s52
      %p61 = scmp.eq.s32.totalorder %s20, 0
      %p62 = por %p60, %p61
      %p63 = scmp.ne.s32.totalorder %s51, %s52
      %p64 = scmp.eq.s32.totalorder %s21, 1
      %p65 = por %p63, %p64
      %p67 = scmp.ne.s32.totalorder %s52, %s66
      %p68 = scmp.eq.s32.totalorder %s21, 0
      %p69 = por %p67, %p68
      %s70 = ssub.s32 %s15, %s22
      %p71 = scmp.eq.s32.totalorder %s70, 0
      %s73 = sadd.s32 %s72, 1
      %s74 = scalar_select %p71, %s72, %s73
      %p77 = pneg %p71
      %p78 = scmp.eq.s32.totalorder %s15, 1
      %p79 = por %p77, %p78
      %p80 = scmp.ne.s32.totalorder %s72, %s75
      %p81 = scmp.eq.s32.totalorder %s15, 0
      %p82 = por %p80, %p81
      %p83 = scmp.ne.s32.totalorder %s72, %s75
      %p84 = scmp.eq.s32.totalorder %s20, 1
      %p85 = por %p83, %p84
      %p86 = scmp.ne.s32.totalorder %s75, %s76
      %p87 = scmp.eq.s32.totalorder %s20, 0
      %p88 = por %p86, %p87
      %p89 = scmp.ne.s32.totalorder %s75, %s76
      %p90 = scmp.eq.s32.totalorder %s21, 1
      %p91 = por %p89, %p90
      %p93 = scmp.ne.s32.totalorder %s76, %s92
      %p94 = scmp.eq.s32.totalorder %s21, 0
      %p95 = por %p93, %p94
      %p96 = scmp.le.s32.totalorder 1, %s15
      %p97 = scmp.lt.s32.totalorder %s15, 3
      %p98 = pnand %p96, %p97
      %p99 = pneg %p98
      // Predicated region
      $region9: #{tpu_custom_call.1} parent=5 // pred_check
        _
      $region10: #{tpu_custom_call.1} parent=5 // pred_check_branch
        %101 = sbr.rel (%p98) target = $region12
      $region11: #{tpu_custom_call.1} parent=5 // pred_region
        %s102 = ssub.s32 %s15, 1
        // Predicated region
        $region13: #{tpu_custom_call.1} parent=11 // pred_check
          %p103 = pneg %p62
        $region14: #{tpu_custom_call.1} parent=11 // pred_check_branch
          %105 = sbr.rel (%p103) target = $region16
        $region15: #{tpu_custom_call.1} parent=11 // pred_region
          %s107 = ssub.s32 256, 256
          %108 = vsyncadd [#allocation6], %s107
          %s109 = sshll.u32 [#allocation5], 4
          %s110 = int_to_ptr.vmem [resolvable:$true] %s109
          %115 = dma.hbm_to_vmem [thread:$0]  %s1, 256, %s110, [#allocation6], 128, 128, 8
        $region16: #{tpu_custom_call.1} parent=11 // pred_fallthru
          _
      $region12: #{tpu_custom_call.1} parent=5 // pred_fallthru
        _
      %p116 = scmp.lt.s32.totalorder %s15, 2
      // Predicated region
      $region17: #{tpu_custom_call.1} parent=5 // pred_check
        %p117 = pneg %p116
      $region18: #{tpu_custom_call.1} parent=5 // pred_check_branch
        %119 = sbr.rel (%p117) target = $region20
      $region19: #{tpu_custom_call.1} parent=5 // pred_region
        // Predicated region
        $region21: #{tpu_custom_call.1} parent=19 // pred_check
          %p120 = pneg %p35
        $region22: #{tpu_custom_call.1} parent=19 // pred_check_branch
          %122 = sbr.rel (%p120) target = $region24
        $region23: #{tpu_custom_call.1} parent=19 // pred_region
          %s123 = sand.u32 %s25, 1
          %s124 = scalar_lea.sflag [#allocation3], %s123
          %s125 = sand.u32 %s25, 1
          %s126 = smul.addr %s125, 4
          %s127 = scalar_lea.vmem [#allocation2], %s126
          %s128 = smul.u32 4, %s15
          %s130 = ssub.s32 64, 64
          %131 = vsyncadd %s124, %s130
          %s132 = smul.addr %s128, 16
          %s133 = scalar_lea.hbm %s0, %s132
          %s135 = sshll.u32 %s127, 4
          %s136 = int_to_ptr.vmem [resolvable:$true] %s135
          %138 = dma.hbm_to_vmem [thread:$0]  %s133, 64, %s136, %s124
        $region24: #{tpu_custom_call.1} parent=19 // pred_fallthru
          _
      $region20: #{tpu_custom_call.1} parent=5 // pred_fallthru
        _
      %p139 = scmp.le.s32.totalorder 1, %s15
      %p140 = scmp.lt.s32.totalorder %s15, 3
      %p141 = pnand %p139, %p140
      %p142 = pneg %p141
      // Predicated region
      $region25: #{tpu_custom_call.1} parent=5 // pred_check
        _
      $region26: #{tpu_custom_call.1} parent=5 // pred_check_branch
        %144 = sbr.rel (%p141) target = $region28
      $region27: #{tpu_custom_call.1} parent=5 // pred_region
        %s145 = ssub.s32 %s15, 1
        %s146 = sand.u32 %s28, 1
        %s147 = scalar_lea.sflag [#allocation3], %s146
        %s148 = sand.u32 %s28, 1
        %s149 = smul.addr %s148, 4
        %s150 = scalar_lea.vmem [#allocation2], %s149
        // Predicated region
        $region29: #{tpu_custom_call.1} parent=27 // pred_check
          %p151 = pneg %p41
        $region30: #{tpu_custom_call.1} parent=27 // pred_check_branch
          %153 = sbr.rel (%p151) target = $region32
        $region31: #{tpu_custom_call.1} parent=27 // pred_region
          %154 = dma.done %s147, 64
        $region32: #{tpu_custom_call.1} parent=27 // pred_fallthru
          _
        // Predicated region
        $region33: #{tpu_custom_call.1} parent=27 // pred_check
          %p155 = pneg %p62
        $region34: #{tpu_custom_call.1} parent=27 // pred_check_branch
          %157 = sbr.rel (%p155) target = $region36
        $region35: #{tpu_custom_call.1} parent=27 // pred_region
          %158 = dma.done [#allocation6], 256
        $region36: #{tpu_custom_call.1} parent=27 // pred_fallthru
          _
        %s159 = sand.u32 %s28, 1
        %s160 = scalar_lea.sflag [#allocation3], %s159
        %s161 = sand.u32 %s28, 1
        %s162 = smul.addr %s161, 4
        %s163 = scalar_lea.vmem [#allocation2], %s162
        %p164 = pneg %p41
        %p165 = pneg %p38
        %p166 = pneg %p62
        %p167 = pneg %p59
        %p168 = pneg %p88
        %p169 = pneg %p85
        %s170 = sand.u32 %s75, 1
        %s171 = scalar_lea.sflag [#allocation4], %s170
        %s172 = sand.u32 %s75, 1
        %s173 = smul.addr %s172, 4
        %s174 = scalar_lea.vmem [#allocation7], %s173
        %s175 = smul.u32 4, %s20
        %s176 = smul.u32 4, %s20
        %v177 = vld [vmem:[%s150] sm:$0xf]
        %v178 = vld [vmem:[#allocation5] sm:$0xff]
        %v179 = vld [vmem:[#allocation5 + $0x8] sm:$0xff]
        %181 = vset.pattern.permute.xlu0 32
        %182 = vperm.xlu0 %181, %v178
        %v183 = vpop.permute.xlu0 %182
        %186 = vset.pattern.permute.xlu0 32
        %187 = vperm.xlu0 %186, %v179
        %v188 = vpop.permute.xlu0 %187
        %v191 = vlaneseq
        %v192 = vshrl.u32 %v191, 7
        %v193 = vsub.s32 0, %v192
        %v194 = vrot.slane %v177, %v193
        %v195 = vlaneseq
        %v196 = vshrl.u32 %v195, 7
        %v197 = vsub.s32 1, %v196
        %v198 = vrot.slane %v177, %v197
        %v199 = vlaneseq
        %v200 = vshrl.u32 %v199, 7
        %v201 = vsub.s32 2, %v200
        %v202 = vrot.slane %v177, %v201
        %v203 = vlaneseq
        %v204 = vshrl.u32 %v203, 7
        %v205 = vsub.s32 3, %v204
        %v206 = vrot.slane %v177, %v205
        %v211 = vmul.f32 %v183, %v194
        %v212 = vmul.f32 %v183, %v198
        %v213 = vmul.f32 %v183, %v202
        %v214 = vmul.f32 %v183, %v206
        %v215 = vmul.f32 %v188, %v194
        %v216 = vmul.f32 %v188, %v198
        %v217 = vmul.f32 %v188, %v202
        %v218 = vmul.f32 %v188, %v206
        %219 = vset.pattern.permute.xlu0 34
        %220 = vperm.xlu0 %219, %v178
        %v221 = vpop.permute.xlu0 %220
        %223 = vset.pattern.permute.xlu0 34
        %224 = vperm.xlu0 %223, %v179
        %v225 = vpop.permute.xlu0 %224
        %v227 = vadd.f32 %v211, %v221
        %v228 = vadd.f32 %v212, %v221
        %v229 = vadd.f32 %v213, %v221
        %v230 = vadd.f32 %v214, %v221
        %v231 = vadd.f32 %v215, %v225
        %v232 = vadd.f32 %v216, %v225
        %v233 = vadd.f32 %v217, %v225
        %v234 = vadd.f32 %v218, %v225
        %v235 = vmax.f32 %v227, 0.0
        %v236 = vmax.f32 %v228, 0.0
        %v237 = vmax.f32 %v229, 0.0
        %v238 = vmax.f32 %v230, 0.0
        %v239 = vmax.f32 %v231, 0.0
        %v240 = vmax.f32 %v232, 0.0
        %v241 = vmax.f32 %v233, 0.0
        %v242 = vmax.f32 %v234, 0.0
        %243 = vset.pattern.permute.xlu0 35
        %244 = vperm.xlu0 %243, %v178
        %v245 = vpop.permute.xlu0 %244
        %247 = vset.pattern.permute.xlu0 35
        %248 = vperm.xlu0 %247, %v179
        %v249 = vpop.permute.xlu0 %248
        %vm251 = vcmask 130048
        %v252 = vsel %vm251, %v178, 0
        %v254 = vsel %vm251, %v179, 0
        %256 = vmatprep.subr.mxu0 0.0
        %257 = vmatpush1.msra.mxu0 0.0
        %258 = vmatprep.subr.mxu0 0.0
        %259 = vmatpush1.msra.mxu0 0.0
        %260 = vmatprep.subr.mxu0 0.0
        %261 = vmatpush1.msra.mxu0 0.0
        %262 = vmatprep.subr.mxu0 0.0
        %263 = vmatpush1.msra.mxu0 0.0
        %264 = vmatprep.subr.mxu0 0.0
        %265 = vmatpush1.msra.mxu0 0.0
        %266 = vmatprep.subr.mxu0 0.0
        %267 = vmatpush1.msra.mxu0 0.0
        %268 = vmatprep.subr.mxu0 0.0
        %269 = vmatpush1.msra.mxu0 0.0
        %270 = vmatprep.subr.mxu0 0.0
        %271 = vmatpush1.msra.mxu0 0.0
        %272 = vmatprep.subr.mxu0 0.0
        %273 = vmatpush1.msra.mxu0 0.0
        %274 = vmatprep.subr.mxu0 0.0
        %275 = vmatpush1.msra.mxu0 0.0
        %276 = vmatprep.subr.mxu0 0.0
        %277 = vmatpush1.msra.mxu0 0.0
        %278 = vmatprep.subr.mxu0 0.0
        %279 = vmatpush1.msra.mxu0 0.0
        %280 = vmatprep.subr.mxu0 0.0
        %281 = vmatpush1.msra.mxu0 0.0
        %282 = vmatprep.subr.mxu0 0.0
        %283 = vmatpush1.msra.mxu0 0.0
        %284 = vmatprep.subr.mxu0 %v240
        %285 = vmatpush1.msra.mxu0 %v239
        %286 = vmatprep.subr.mxu0 %v236
        %287 = vmatpush1.msra.mxu0 %v235
        %288 = vmatprep.subr.mxu0 0.0
        %289 = vmatpush2.msra.mxu0 0.0
        %290 = vmatprep.subr.mxu0 0.0
        %291 = vmatpush2.msra.mxu0 0.0
        %292 = vmatprep.subr.mxu0 0.0
        %293 = vmatpush2.msra.mxu0 0.0
        %294 = vmatprep.subr.mxu0 0.0
        %295 = vmatpush2.msra.mxu0 0.0
        %296 = vmatprep.subr.mxu0 0.0
        %297 = vmatpush2.msra.mxu0 0.0
        %298 = vmatprep.subr.mxu0 0.0
        %299 = vmatpush2.msra.mxu0 0.0
        %300 = vmatprep.subr.mxu0 0.0
        %301 = vmatpush2.msra.mxu0 0.0
        %302 = vmatprep.subr.mxu0 0.0
        %303 = vmatpush2.msra.mxu0 0.0
        %304 = vmatprep.subr.mxu0 0.0
        %305 = vmatpush2.msra.mxu0 0.0
        %306 = vmatprep.subr.mxu0 0.0
        %307 = vmatpush2.msra.mxu0 0.0
        %308 = vmatprep.subr.mxu0 0.0
        %309 = vmatpush2.msra.mxu0 0.0
        %310 = vmatprep.subr.mxu0 0.0
        %311 = vmatpush2.msra.mxu0 0.0
        %312 = vmatprep.subr.mxu0 0.0
        %313 = vmatpush2.msra.mxu0 0.0
        %314 = vmatprep.subr.mxu0 0.0
        %315 = vmatpush2.msra.mxu0 0.0
        %316 = vmatprep.subr.mxu0 0.0
        %317 = vmatpush2.msra.mxu0 0.0
        %318 = vmatprep.subr.mxu0 0.0
        %319 = vmatpush2.msra.mxu0 0.0
        %320 = vmatprep.mubr.f32.mxu0 0.0
        %321 = vmatmul.mubr.f32.gmra.mxu0 %v252
        %v322 = vpop.f32.mrf.mxu0
        %v323 = vadd.f32 %v245, %v322
        %v324 = vpop.f32.mrf.mxu0
        %v325 = vadd.f32 %v245, %v324
        %326 = vmatprep.mubr.f32.mxu0 0.0
        %327 = vmatmul.mubr.f32.gmra.mxu0 %v254
        %v328 = vpop.f32.mrf.mxu0
        %v329 = vadd.f32 %v249, %v328
        %v330 = vpop.f32.mrf.mxu0
        %v331 = vadd.f32 %v249, %v330
        %332 = vdwg.mxu0
        %333 = vmatprep.subr.mxu0 0.0
        %334 = vmatpush1.msra.mxu0 0.0
        %335 = vmatprep.subr.mxu0 0.0
        %336 = vmatpush1.msra.mxu0 0.0
        %337 = vmatprep.subr.mxu0 0.0
        %338 = vmatpush1.msra.mxu0 0.0
        %339 = vmatprep.subr.mxu0 0.0
        %340 = vmatpush1.msra.mxu0 0.0
        %341 = vmatprep.subr.mxu0 0.0
        %342 = vmatpush1.msra.mxu0 0.0
        %343 = vmatprep.subr.mxu0 0.0
        %344 = vmatpush1.msra.mxu0 0.0
        %345 = vmatprep.subr.mxu0 0.0
        %346 = vmatpush1.msra.mxu0 0.0
        %347 = vmatprep.subr.mxu0 0.0
        %348 = vmatpush1.msra.mxu0 0.0
        %349 = vmatprep.subr.mxu0 0.0
        %350 = vmatpush1.msra.mxu0 0.0
        %351 = vmatprep.subr.mxu0 0.0
        %352 = vmatpush1.msra.mxu0 0.0
        %353 = vmatprep.subr.mxu0 0.0
        %354 = vmatpush1.msra.mxu0 0.0
        %355 = vmatprep.subr.mxu0 0.0
        %356 = vmatpush1.msra.mxu0 0.0
        %357 = vmatprep.subr.mxu0 0.0
        %358 = vmatpush1.msra.mxu0 0.0
        %359 = vmatprep.subr.mxu0 0.0
        %360 = vmatpush1.msra.mxu0 0.0
        %361 = vmatprep.subr.mxu0 %v242
        %362 = vmatpush1.msra.mxu0 %v241
        %363 = vmatprep.subr.mxu0 %v238
        %364 = vmatpush1.msra.mxu0 %v237
        %365 = vmatprep.subr.mxu0 0.0
        %366 = vmatpush2.msra.mxu0 0.0
        %367 = vmatprep.subr.mxu0 0.0
        %368 = vmatpush2.msra.mxu0 0.0
        %369 = vmatprep.subr.mxu0 0.0
        %370 = vmatpush2.msra.mxu0 0.0
        %371 = vmatprep.subr.mxu0 0.0
        %372 = vmatpush2.msra.mxu0 0.0
        %373 = vmatprep.subr.mxu0 0.0
        %374 = vmatpush2.msra.mxu0 0.0
        %375 = vmatprep.subr.mxu0 0.0
        %376 = vmatpush2.msra.mxu0 0.0
        %377 = vmatprep.subr.mxu0 0.0
        %378 = vmatpush2.msra.mxu0 0.0
        %379 = vmatprep.subr.mxu0 0.0
        %380 = vmatpush2.msra.mxu0 0.0
        %381 = vmatprep.subr.mxu0 0.0
        %382 = vmatpush2.msra.mxu0 0.0
        %383 = vmatprep.subr.mxu0 0.0
        %384 = vmatpush2.msra.mxu0 0.0
        %385 = vmatprep.subr.mxu0 0.0
        %386 = vmatpush2.msra.mxu0 0.0
        %387 = vmatprep.subr.mxu0 0.0
        %388 = vmatpush2.msra.mxu0 0.0
        %389 = vmatprep.subr.mxu0 0.0
        %390 = vmatpush2.msra.mxu0 0.0
        %391 = vmatprep.subr.mxu0 0.0
        %392 = vmatpush2.msra.mxu0 0.0
        %393 = vmatprep.subr.mxu0 0.0
        %394 = vmatpush2.msra.mxu0 0.0
        %395 = vmatprep.subr.mxu0 0.0
        %396 = vmatpush2.msra.mxu0 0.0
        %397 = vmatprep.mubr.f32.mxu0 0.0
        %398 = vmatmul.mubr.f32.gmra.mxu0 %v252
        %v399 = vpop.f32.mrf.mxu0
        %v400 = vadd.f32 %v245, %v399
        %v401 = vpop.f32.mrf.mxu0
        %v402 = vadd.f32 %v245, %v401
        %403 = vmatprep.mubr.f32.mxu0 0.0
        %404 = vmatmul.mubr.f32.gmra.mxu0 %v254
        %v405 = vpop.f32.mrf.mxu0
        %v406 = vadd.f32 %v249, %v405
        %v407 = vpop.f32.mrf.mxu0
        %v408 = vadd.f32 %v249, %v407
        %409 = vdwg.mxu0
        %v410 = vmax.f32 %v323, 0.0
        %v411 = vmax.f32 %v325, 0.0
        %v412 = vmax.f32 %v400, 0.0
        %v413 = vmax.f32 %v402, 0.0
        %v414 = vmax.f32 %v329, 0.0
        %v415 = vmax.f32 %v331, 0.0
        %v416 = vmax.f32 %v406, 0.0
        %v417 = vmax.f32 %v408, 0.0
        %418 = vset.pattern.permute.xlu0 36
        %419 = vperm.xlu0 %418, %v178
        %v420 = vpop.permute.xlu0 %419
        %422 = vset.pattern.permute.xlu0 36
        %423 = vperm.xlu0 %422, %v179
        %v424 = vpop.permute.xlu0 %423
        %426 = vrot.lane.b32.xlu0 %v178, 112
        %v427 = vpop.permute.xlu0 %426
        %428 = vrot.lane.b32.xlu0 %v179, 112
        %v429 = vpop.permute.xlu0 %428
        %v430 = vsel %vm251, %v427, 0
        %v432 = vsel %vm251, %v429, 0
        %434 = vmatprep.subr.mxu0 0.0
        %435 = vmatpush1.msra.mxu0 0.0
        %436 = vmatprep.subr.mxu0 0.0
        %437 = vmatpush1.msra.mxu0 0.0
        %438 = vmatprep.subr.mxu0 0.0
        %439 = vmatpush1.msra.mxu0 0.0
        %440 = vmatprep.subr.mxu0 0.0
        %441 = vmatpush1.msra.mxu0 0.0
        %442 = vmatprep.subr.mxu0 0.0
        %443 = vmatpush1.msra.mxu0 0.0
        %444 = vmatprep.subr.mxu0 0.0
        %445 = vmatpush1.msra.mxu0 0.0
        %446 = vmatprep.subr.mxu0 0.0
        %447 = vmatpush1.msra.mxu0 0.0
        %448 = vmatprep.subr.mxu0 0.0
        %449 = vmatpush1.msra.mxu0 0.0
        %450 = vmatprep.subr.mxu0 0.0
        %451 = vmatpush1.msra.mxu0 0.0
        %452 = vmatprep.subr.mxu0 0.0
        %453 = vmatpush1.msra.mxu0 0.0
        %454 = vmatprep.subr.mxu0 0.0
        %455 = vmatpush1.msra.mxu0 0.0
        %456 = vmatprep.subr.mxu0 0.0
        %457 = vmatpush1.msra.mxu0 0.0
        %458 = vmatprep.subr.mxu0 0.0
        %459 = vmatpush1.msra.mxu0 0.0
        %460 = vmatprep.subr.mxu0 0.0
        %461 = vmatpush1.msra.mxu0 0.0
        %462 = vmatprep.subr.mxu0 %v415
        %463 = vmatpush1.msra.mxu0 %v414
        %464 = vmatprep.subr.mxu0 %v411
        %465 = vmatpush1.msra.mxu0 %v410
        %466 = vmatprep.subr.mxu0 0.0
        %467 = vmatpush2.msra.mxu0 0.0
        %468 = vmatprep.subr.mxu0 0.0
        %469 = vmatpush2.msra.mxu0 0.0
        %470 = vmatprep.subr.mxu0 0.0
        %471 = vmatpush2.msra.mxu0 0.0
        %472 = vmatprep.subr.mxu0 0.0
        %473 = vmatpush2.msra.mxu0 0.0
        %474 = vmatprep.subr.mxu0 0.0
        %475 = vmatpush2.msra.mxu0 0.0
        %476 = vmatprep.subr.mxu0 0.0
        %477 = vmatpush2.msra.mxu0 0.0
        %478 = vmatprep.subr.mxu0 0.0
        %479 = vmatpush2.msra.mxu0 0.0
        %480 = vmatprep.subr.mxu0 0.0
        %481 = vmatpush2.msra.mxu0 0.0
        %482 = vmatprep.subr.mxu0 0.0
        %483 = vmatpush2.msra.mxu0 0.0
        %484 = vmatprep.subr.mxu0 0.0
        %485 = vmatpush2.msra.mxu0 0.0
        %486 = vmatprep.subr.mxu0 0.0
        %487 = vmatpush2.msra.mxu0 0.0
        %488 = vmatprep.subr.mxu0 0.0
        %489 = vmatpush2.msra.mxu0 0.0
        %490 = vmatprep.subr.mxu0 0.0
        %491 = vmatpush2.msra.mxu0 0.0
        %492 = vmatprep.subr.mxu0 0.0
        %493 = vmatpush2.msra.mxu0 0.0
        %494 = vmatprep.subr.mxu0 0.0
        %495 = vmatpush2.msra.mxu0 0.0
        %496 = vmatprep.subr.mxu0 0.0
        %497 = vmatpush2.msra.mxu0 0.0
        %498 = vmatprep.mubr.f32.mxu0 0.0
        %499 = vmatmul.mubr.f32.gmra.mxu0 %v430
        %v500 = vpop.f32.mrf.mxu0
        %v501 = vadd.f32 %v420, %v500
        %v502 = vpop.f32.mrf.mxu0
        %v503 = vadd.f32 %v420, %v502
        %504 = vmatprep.mubr.f32.mxu0 0.0
        %505 = vmatmul.mubr.f32.gmra.mxu0 %v432
        %v506 = vpop.f32.mrf.mxu0
        %v507 = vadd.f32 %v424, %v506
        %v508 = vpop.f32.mrf.mxu0
        %v509 = vadd.f32 %v424, %v508
        %510 = vdwg.mxu0
        %511 = vmatprep.subr.mxu0 0.0
        %512 = vmatpush1.msra.mxu0 0.0
        %513 = vmatprep.subr.mxu0 0.0
        %514 = vmatpush1.msra.mxu0 0.0
        %515 = vmatprep.subr.mxu0 0.0
        %516 = vmatpush1.msra.mxu0 0.0
        %517 = vmatprep.subr.mxu0 0.0
        %518 = vmatpush1.msra.mxu0 0.0
        %519 = vmatprep.subr.mxu0 0.0
        %520 = vmatpush1.msra.mxu0 0.0
        %521 = vmatprep.subr.mxu0 0.0
        %522 = vmatpush1.msra.mxu0 0.0
        %523 = vmatprep.subr.mxu0 0.0
        %524 = vmatpush1.msra.mxu0 0.0
        %525 = vmatprep.subr.mxu0 0.0
        %526 = vmatpush1.msra.mxu0 0.0
        %527 = vmatprep.subr.mxu0 0.0
        %528 = vmatpush1.msra.mxu0 0.0
        %529 = vmatprep.subr.mxu0 0.0
        %530 = vmatpush1.msra.mxu0 0.0
        %531 = vmatprep.subr.mxu0 0.0
        %532 = vmatpush1.msra.mxu0 0.0
        %533 = vmatprep.subr.mxu0 0.0
        %534 = vmatpush1.msra.mxu0 0.0
        %535 = vmatprep.subr.mxu0 0.0
        %536 = vmatpush1.msra.mxu0 0.0
        %537 = vmatprep.subr.mxu0 0.0
        %538 = vmatpush1.msra.mxu0 0.0
        %539 = vmatprep.subr.mxu0 %v417
        %540 = vmatpush1.msra.mxu0 %v416
        %541 = vmatprep.subr.mxu0 %v413
        %542 = vmatpush1.msra.mxu0 %v412
        %543 = vmatprep.subr.mxu0 0.0
        %544 = vmatpush2.msra.mxu0 0.0
        %545 = vmatprep.subr.mxu0 0.0
        %546 = vmatpush2.msra.mxu0 0.0
        %547 = vmatprep.subr.mxu0 0.0
        %548 = vmatpush2.msra.mxu0 0.0
        %549 = vmatprep.subr.mxu0 0.0
        %550 = vmatpush2.msra.mxu0 0.0
        %551 = vmatprep.subr.mxu0 0.0
        %552 = vmatpush2.msra.mxu0 0.0
        %553 = vmatprep.subr.mxu0 0.0
        %554 = vmatpush2.msra.mxu0 0.0
        %555 = vmatprep.subr.mxu0 0.0
        %556 = vmatpush2.msra.mxu0 0.0
        %557 = vmatprep.subr.mxu0 0.0
        %558 = vmatpush2.msra.mxu0 0.0
        %559 = vmatprep.subr.mxu0 0.0
        %560 = vmatpush2.msra.mxu0 0.0
        %561 = vmatprep.subr.mxu0 0.0
        %562 = vmatpush2.msra.mxu0 0.0
        %563 = vmatprep.subr.mxu0 0.0
        %564 = vmatpush2.msra.mxu0 0.0
        %565 = vmatprep.subr.mxu0 0.0
        %566 = vmatpush2.msra.mxu0 0.0
        %567 = vmatprep.subr.mxu0 0.0
        %568 = vmatpush2.msra.mxu0 0.0
        %569 = vmatprep.subr.mxu0 0.0
        %570 = vmatpush2.msra.mxu0 0.0
        %571 = vmatprep.subr.mxu0 0.0
        %572 = vmatpush2.msra.mxu0 0.0
        %573 = vmatprep.subr.mxu0 0.0
        %574 = vmatpush2.msra.mxu0 0.0
        %575 = vmatprep.mubr.f32.mxu0 0.0
        %576 = vmatmul.mubr.f32.gmra.mxu0 %v430
        %v577 = vpop.f32.mrf.mxu0
        %v578 = vadd.f32 %v420, %v577
        %v579 = vpop.f32.mrf.mxu0
        %v580 = vadd.f32 %v420, %v579
        %581 = vmatprep.mubr.f32.mxu0 0.0
        %582 = vmatmul.mubr.f32.gmra.mxu0 %v432
        %v583 = vpop.f32.mrf.mxu0
        %v584 = vadd.f32 %v424, %v583
        %v585 = vpop.f32.mrf.mxu0
        %v586 = vadd.f32 %v424, %v585
        %587 = vdwg.mxu0
        %v588 = vmax.f32 %v501, 0.0
        %v589 = vmax.f32 %v503, 0.0
        %v590 = vmax.f32 %v578, 0.0
        %v591 = vmax.f32 %v580, 0.0
        %v592 = vmax.f32 %v507, 0.0
        %v593 = vmax.f32 %v509, 0.0
        %v594 = vmax.f32 %v584, 0.0
        %v595 = vmax.f32 %v586, 0.0
        %596 = vset.pattern.permute.xlu0 33
        %597 = vperm.xlu0 %596, %v178
        %v598 = vpop.permute.xlu0 %597
        %600 = vset.pattern.permute.xlu0 33
        %601 = vperm.xlu0 %600, %v179
        %v602 = vpop.permute.xlu0 %601
        %v604 = vmul.f32 %v598, %v588
        %v605 = vmul.f32 %v598, %v589
        %v606 = vmul.f32 %v598, %v590
        %v607 = vmul.f32 %v598, %v591
        %v608 = vmul.f32 %v602, %v592
        %v609 = vmul.f32 %v602, %v593
        %v610 = vmul.f32 %v602, %v594
        %v611 = vmul.f32 %v602, %v595
        %v612 = vadd.f32 %v604, %v608
        %v613 = vrot.slane %v612, 4
        %v614 = vadd.f32 %v612, %v613
        %v615 = vrot.slane %v614, 2
        %v616 = vadd.f32 %v614, %v615
        %v617 = vrot.slane %v616, 1
        %v618 = vadd.f32 %v616, %v617
        %v619 = vadd.f32 %v605, %v609
        %v620 = vrot.slane %v619, 4
        %v621 = vadd.f32 %v619, %v620
        %v622 = vrot.slane %v621, 2
        %v623 = vadd.f32 %v621, %v622
        %v624 = vrot.slane %v623, 1
        %v625 = vadd.f32 %v623, %v624
        %v626 = vadd.f32 %v606, %v610
        %v627 = vrot.slane %v626, 4
        %v628 = vadd.f32 %v626, %v627
        %v629 = vrot.slane %v628, 2
        %v630 = vadd.f32 %v628, %v629
        %v631 = vrot.slane %v630, 1
        %v632 = vadd.f32 %v630, %v631
        %v633 = vadd.f32 %v607, %v611
        %v634 = vrot.slane %v633, 4
        %v635 = vadd.f32 %v633, %v634
        %v636 = vrot.slane %v635, 2
        %v637 = vadd.f32 %v635, %v636
        %v638 = vrot.slane %v637, 1
        %v639 = vadd.f32 %v637, %v638
        %640 = vset.pattern.permute.xlu0 37
        %641 = vperm.xlu0 %640, %v178
        %v642 = vpop.permute.xlu0 %641
        %v644 = vadd.f32 %v618, %v642
        %v645 = vadd.f32 %v625, %v642
        %v646 = vadd.f32 %v632, %v642
        %v647 = vadd.f32 %v639, %v642
        %v652 = vcombine.low %v644, %v645
        %v653 = vcombine.low %v646, %v647
        %v655 = vunpack.c.l.s4 1966171168
        %v656 = vunpack.c.0.s8 %v655
        %v657 = vlaneseq
        %v658 = vshrl.u32 %v657, 7
        %v659 = vsub.s32 %v656, %v658
        %v660 = vrot.slane %v652, %v659
        %v662 = vunpack.c.l.s4 1966171168
        %v663 = vunpack.c.0.s8 %v662
        %v664 = vlaneseq
        %v665 = vshrl.u32 %v664, 7
        %v666 = vsub.s32 %v663, %v665
        %v667 = vrot.slane %v653, %v666
        %v668 = vcombine.low %v660, %v667
        %v670 = vunpack.c.l.s4 1966171168
        %v671 = vunpack.c.0.s8 %v670
        %v672 = vlaneseq
        %v673 = vshrl.u32 %v672, 7
        %v674 = vsub.s32 %v671, %v673
        %v675 = vrot.slane %v668, %v674
        %v677 = vlaneseq
        %vm678 = vcmp.ge.s32.totalorder %v677, 0
        %vm679 = vcmp.lt.s32.totalorder %v677, 512
        %vm680 = vmand %vm678, %vm679
        %681 = vst.msk [vmem:[%s174] sm:$0xf] %vm680, %v675
        %s682 = sand.u32 %s75, 1
        %s683 = scalar_lea.sflag [#allocation4], %s682
        %s684 = sand.u32 %s75, 1
        %s685 = smul.addr %s684, 4
        %s686 = scalar_lea.vmem [#allocation7], %s685
        // Predicated region
        $region37: #{tpu_custom_call.1} parent=27 // pred_check
          %p687 = pneg %p85
        $region38: #{tpu_custom_call.1} parent=27 // pred_check_branch
          %689 = sbr.rel (%p687) target = $region40
        $region39: #{tpu_custom_call.1} parent=27 // pred_region
          %s690 = smul.u32 4, %s20
          %s692 = ssub.s32 64, 64
          %693 = vsyncadd %s683, %s692
          %s694 = smul.addr %s690, 16
          %s695 = scalar_lea.hbm %s2, %s694
          %s697 = sshll.u32 %s686, 4
          %s698 = int_to_ptr.vmem [resolvable:$true] %s697
          %700 = dma.vmem_to_hbm [thread:$0]  %s698, 64, %s695, %s683
        $region40: #{tpu_custom_call.1} parent=27 // pred_fallthru
          _
      $region28: #{tpu_custom_call.1} parent=5 // pred_fallthru
        _
      %p701 = scmp.le.s32.totalorder 2, %s15
      // Predicated region
      $region41: #{tpu_custom_call.1} parent=5 // pred_check
        %p702 = pneg %p701
      $region42: #{tpu_custom_call.1} parent=5 // pred_check_branch
        %704 = sbr.rel (%p702) target = $region44
      $region43: #{tpu_custom_call.1} parent=5 // pred_region
        %s705 = ssub.s32 %s15, 2
        // Predicated region
        $region45: #{tpu_custom_call.1} parent=43 // pred_check
          %p706 = pneg %p91
        $region46: #{tpu_custom_call.1} parent=43 // pred_check_branch
          %708 = sbr.rel (%p706) target = $region48
        $region47: #{tpu_custom_call.1} parent=43 // pred_region
          %s709 = sand.u32 %s76, 1
          %s710 = scalar_lea.sflag [#allocation4], %s709
          %s711 = sand.u32 %s76, 1
          %s712 = smul.addr %s711, 4
          %s713 = scalar_lea.vmem [#allocation7], %s712
          %714 = dma.done %s710, 64
        $region48: #{tpu_custom_call.1} parent=43 // pred_fallthru
          _
      $region44: #{tpu_custom_call.1} parent=5 // pred_fallthru
        _
    $region6: #{tpu_custom_call.1} parent=1 // loop_footer
      %s19 = sadd.s32 1, %s15
    $region7: #{tpu_custom_call.1} parent=1 // loop_footer_branch
      %14 = sbr.rel target = $region3
    $region8: #{tpu_custom_call.1} parent=1 // loop_exit
      _
    %715 = vsyncpa [#allocation3], 1
    %s716 = scalar_lea.sflag [#allocation3], 1
    %717 = vsyncpa %s716, 1
    %718 = vsyncpa [#allocation6], 1
    %719 = vsyncpa [#allocation4], 1
    %s720 = scalar_lea.sflag [#allocation4], 1
    %721 = vsyncpa %s720, 1

</llo_original>
